<compile_context>
chip_gen: v5e
topology: v5e:2x2
jax: 0.10.0
libtpu: 0.0.40
codegen_flags: <defaults>
</compile_context>

<pallas_src>
import functools

import jax
import jax.numpy as jnp
from jax.experimental import pallas as pl
from jax.experimental.pallas import tpu as pltpu


# ----------------------------------------------------------------------------
# Pallas kernel: purely elementwise, HBM-bandwidth-bound recombination.
#   out[b, c, hw] = x[b, c, hw] * sp[b, hw] * ch[b, c]
# ----------------------------------------------------------------------------
def recombine_kernel(x_ref, sp_ref, ch_ref, out_ref):
    xb = x_ref[0]      # (C, T_HW)  one batch element, one lane-dense HW tile
    sp = sp_ref[0]     # (1, T_HW)  pre-scaled spatial weights (broadcast over C)
    ch = ch_ref[0]     # (C, 1)     pre-scaled channel weights (broadcast over HW)
    out_ref[0] = (xb * sp * ch).astype(out_ref.dtype)


# ----------------------------------------------------------------------------
# Tiny MLPs stay in plain XLA (batched over B; keeps the huge W2 out of VMEM).
# Returns the already-affine-folded scale factors.
# ----------------------------------------------------------------------------
def compute_scales(localization, semantic, params):
    W1, b1, W2, b2, W3, b3, W4, b4 = params
    # Spatial net: Linear(C->hidden) -> LeakyReLU(0.1) -> Linear(hidden->HW)
    h = localization @ W1 + b1
    h = jnp.where(h > 0, h, 0.1 * h)
    # Stream the big weight in bf16 (HBM-bound at small B), accumulate in f32.
    w_sp = jax.lax.dot(h.astype(W2.dtype), W2,
                       preferred_element_type=jnp.float32) + b2        # (B, HW)
    # Channel net: Linear(C->C) -> LeakyReLU(0.1) -> Linear(C->C) -> Softmax(dim=1)
    h2 = semantic @ W3 + b3
    h2 = jnp.where(h2 > 0, h2, 0.1 * h2)
    w_ch = jax.nn.softmax(h2 @ W4 + b4, axis=1)                        # (B, C)
    # Fold the affine: 2*x*(1+w_sp)*(1+w_ch) == x * (2 + 2*w_sp) * (1 + w_ch)
    sp_scaled = (2.0 + 2.0 * w_sp).astype(jnp.float32)                 # (B, HW)
    ch_scaled = (1.0 + w_ch).astype(jnp.float32)                       # (B, C)
    return sp_scaled, ch_scaled


@functools.partial(jax.jit, static_argnames=("t_hw",))
def reconstruct_network(x, localization, semantic, params, *, t_hw=8192):
    """x: (B, C, H, W); localization/semantic: (B, C); params: 4 Linear layers."""
    B, C, H, W = x.shape
    HW = H * W

    sp_scaled, ch_scaled = compute_scales(localization, semantic, params)

    x_flat = x.reshape(B, C, HW)
    sp3 = sp_scaled.reshape(B, 1, HW)
    ch3 = ch_scaled.reshape(B, C, 1)

    # Lane-dense HW tile.  Keep the grid >= 2 steps so both v7x TensorCores
    # get work (no-op on single-TC v5e/v6e).
    T = HW if HW <= t_hw else t_hw
    if B * pl.cdiv(HW, T) < 2 and HW > 128:
        T = ((HW // 2 + 127) // 128) * 128
    grid = (B, pl.cdiv(HW, T))

    out = pl.pallas_call(
        recombine_kernel,
        out_shape=jax.ShapeDtypeStruct((B, C, HW), x.dtype),
        grid_spec=pltpu.PrefetchScalarGridSpec(
            num_scalar_prefetch=0,
            grid=grid,
            in_specs=[
                pl.BlockSpec((1, C, T), lambda b, j: (b, 0, j)),   # x tile
                pl.BlockSpec((1, 1, T), lambda b, j: (b, 0, j)),   # spatial scale tile
                pl.BlockSpec((1, C, 1), lambda b, j: (b, 0, 0)),   # channel scale column
            ],
            out_specs=pl.BlockSpec((1, C, T), lambda b, j: (b, 0, j)),
        ),
        compiler_params=pltpu.CompilerParams(
            dimension_semantics=("parallel", "parallel"),
            vmem_limit_bytes=48 * 1024 * 1024,
        ),
    )(x_flat, sp3, ch3)
    return out.reshape(B, C, H, W)


def reference(x, localization, semantic, params):
    """Pure-JAX reference for the recombination, sharing the same MLP path."""
    B, C, H, W = x.shape
    HW = H * W
    sp_scaled, ch_scaled = compute_scales(localization, semantic, params)
    out = (x.reshape(B, C, HW)
           * sp_scaled.reshape(B, 1, HW)
           * ch_scaled.reshape(B, C, 1))
    return out.reshape(B, C, H, W)


if __name__ == "__main__":
    # Small shapes consistent with the module: x is (B, C, H, W); localization/semantic are (B, C).
    # (Original uses C=256, hidden=1024, H=W=200; scaled down here.)
    B, C, H, W = 2, 32, 16, 16
    HIDDEN = 64
    HW = H * W

    key = jax.random.PRNGKey(0)
    keys = jax.random.split(key, 11)

    def linear_params(kw, kb, fan_in, fan_out, w_dtype=jnp.float32):
        bound = 1.0 / float(fan_in) ** 0.5
        Wm = jax.random.uniform(kw, (fan_in, fan_out), jnp.float32, -bound, bound)
        bm = jax.random.uniform(kb, (1, fan_out), jnp.float32, -bound, bound)
        return Wm.astype(w_dtype), bm

    W1, b1 = linear_params(keys[0], keys[1], C, HIDDEN)                       # Spatial Linear(256->1024) analogue
    W2, b2 = linear_params(keys[2], keys[3], HIDDEN, HW, jnp.bfloat16)        # Spatial Linear(1024->40000) analogue (bf16-stored)
    W3, b3 = linear_params(keys[4], keys[5], C, C)                            # Channel Linear(256->256) analogue
    W4, b4 = linear_params(keys[6], keys[7], C, C)                            # Channel Linear(256->256) analogue
    params = (W1, b1, W2, b2, W3, b3, W4, b4)

    x = jax.random.normal(keys[8], (B, C, H, W), jnp.float32)
    localization = jax.random.normal(keys[9], (B, C), jnp.float32)
    semantic = jax.random.normal(keys[10], (B, C), jnp.float32)

    out = reconstruct_network(x, localization, semantic, params)
    out = jax.block_until_ready(out)

    ref = reference(x, localization, semantic, params)
    assert out.shape == (B, C, H, W)
    assert jnp.allclose(out, ref, rtol=1e-5, atol=1e-5), float(jnp.max(jnp.abs(out - ref)))
    print("KERNEL_OK")
</pallas_src>

<mosaic_0001>
module attributes {stable_mosaic.version = 11 : i64} {
  func.func @recombine_kernel(%arg0: i32, %arg1: i32, %arg2: memref<1x32x256xf32, #tpu.memory_space<vmem>>, %arg3: memref<1x1x256xf32, #tpu.memory_space<vmem>>, %arg4: memref<1x32x1xf32, #tpu.memory_space<vmem>>, %arg5: memref<1x32x256xf32, #tpu.memory_space<vmem>>) attributes {dimension_semantics = [#tpu.dimension_semantics<parallel>, #tpu.dimension_semantics<parallel>], iteration_bounds = array<i64: 2, 1>, scalar_prefetch = 0 : i64, scratch_operands = 0 : i64, tpu.core_type = #tpu.core_type<tc>, window_params = [{transform_indices = @transform_0, window_bounds = array<i64: 1, 32, 256>}, {transform_indices = @transform_1, window_bounds = array<i64: 1, 1, 256>}, {transform_indices = @transform_2, window_bounds = array<i64: 1, 32, 1>}, {transform_indices = @transform_3, window_bounds = array<i64: 1, 32, 256>}]} {
    %c0 = arith.constant 0 : index
    %c0_0 = arith.constant 0 : index
    %c0_1 = arith.constant 0 : index
    %0 = vector.load %arg2[%c0, %c0_0, %c0_1] : memref<1x32x256xf32, #tpu.memory_space<vmem>>, vector<1x32x256xf32>
    %1 = vector.shape_cast %0 : vector<1x32x256xf32> to vector<32x256xf32>
    %c0_2 = arith.constant 0 : index
    %c0_3 = arith.constant 0 : index
    %c0_4 = arith.constant 0 : index
    %2 = vector.load %arg3[%c0_2, %c0_3, %c0_4] : memref<1x1x256xf32, #tpu.memory_space<vmem>>, vector<1x1x256xf32>
    %3 = vector.shape_cast %2 : vector<1x1x256xf32> to vector<1x256xf32>
    %c0_5 = arith.constant 0 : index
    %c0_6 = arith.constant 0 : index
    %c0_7 = arith.constant 0 : index
    %4 = vector.load %arg4[%c0_5, %c0_6, %c0_7] : memref<1x32x1xf32, #tpu.memory_space<vmem>>, vector<1x32x1xf32>
    %5 = vector.shape_cast %4 : vector<1x32x1xf32> to vector<32x1xf32>
    %6 = vector.broadcast %3 : vector<1x256xf32> to vector<32x256xf32>
    %7 = arith.mulf %1, %6 : vector<32x256xf32>
    %8 = vector.broadcast %5 : vector<32x1xf32> to vector<32x256xf32>
    %9 = arith.mulf %7, %8 : vector<32x256xf32>
    %c0_8 = arith.constant 0 : index
    %c0_9 = arith.constant 0 : index
    %c0_10 = arith.constant 0 : index
    %10 = vector.load %arg5[%c0_8, %c0_9, %c0_10] : memref<1x32x256xf32, #tpu.memory_space<vmem>>, vector<1x32x256xf32>
    %11 = vector.shape_cast %10 : vector<1x32x256xf32> to vector<32x256xf32>
    %12 = vector.shape_cast %9 : vector<32x256xf32> to vector<1x32x256xf32>
    tpu.vector_store %arg5[%c0_8, %c0_9, %c0_10], %12 {strides = array<i32>} : memref<1x32x256xf32, #tpu.memory_space<vmem>>, vector<1x32x256xf32>,
    return
  }
  func.func @transform_0(%arg0: i32, %arg1: i32) -> (i32, i32, i32) {
    %c0_i32 = arith.constant 0 : i32
    %c0_i32_0 = arith.constant 0 : i32
    return %arg0, %c0_i32, %arg1 : i32, i32, i32
  }
  func.func @transform_1(%arg0: i32, %arg1: i32) -> (i32, i32, i32) {
    %c0_i32 = arith.constant 0 : i32
    %c0_i32_0 = arith.constant 0 : i32
    return %arg0, %c0_i32, %arg1 : i32, i32, i32
  }
  func.func @transform_2(%arg0: i32, %arg1: i32) -> (i32, i32, i32) {
    %c0_i32 = arith.constant 0 : i32
    %c0_i32_0 = arith.constant 0 : i32
    %c0_i32_1 = arith.constant 0 : i32
    return %arg0, %c0_i32, %c0_i32_0 : i32, i32, i32
  }
  func.func @transform_3(%arg0: i32, %arg1: i32) -> (i32, i32, i32) {
    %c0_i32 = arith.constant 0 : i32
    %c0_i32_0 = arith.constant 0 : i32
    return %arg0, %c0_i32, %arg1 : i32, i32, i32
  }
}

</mosaic_0001>

<llo_original>
// kernel: reconstruct_network.1
$region0: #{reconstruct_network.1}
  #allocation0 [shape = 'u32[]', space=smem, size = 0x4, offset = 0x4, fixed_abs, tag = 'smem constant byte address 0x4 - core index']
  #allocation1 [shape = 'u32[72,128]{1,0:T(1,128)}', space=vmem, size = 0x9000, scoped, tag = 'internal scratch']
  %s0 = inlined_call_operand.vmem [shape: f32[2,32,256], index: 0, kind: input, shape index: {}]
  %s1 = inlined_call_operand.vmem [shape: f32[2,1,256], index: 1, kind: input, shape index: {}]
  %s2 = inlined_call_operand.vmem [shape: f32[2,32,1], index: 2, kind: input, shape index: {}]
  %s3 = inlined_call_operand.vmem [shape: f32[2,32,256], index: 3, kind: output, shape index: {}]
  %s4 = sld [smem:[#allocation0]]
  $region45: #{reconstruct_network.1} parent=0
    _
  %s6 = ssub.s32 1, %s4
  %s7 = scalar_select 0, %s6, %s4
  loop: start=0, step=1, limit=4
  $region2: #{reconstruct_network.1} parent=0 // loop_pre_header
    _
  $region3: #{reconstruct_network.1} parent=0 // loop_header
    %s9 = sphi 0, %s13
    %p10 = scmp.ge.s32.totalorder %s9, 4
    %s16 = sphi 0, %s28
    %s17 = sphi 0, %s24
    %s18 = sphi 0, %s16
    %s19 = sphi 0, %s17
    %s20 = sphi 0, %s18
    %s21 = sphi 0, %s19
    %s33 = sphi 0, %s35
    %s36 = sphi 0, %s33
    %s37 = sphi 0, %s36
    %s53 = sphi 0, %s37
    %s61 = sphi 0, %s63
    %s64 = sphi 0, %s61
    %s65 = sphi 0, %s64
    %s81 = sphi 0, %s65
    %s87 = sphi 0, %s89
    %s90 = sphi 0, %s87
    %s91 = sphi 0, %s90
    %s107 = sphi 0, %s91
    %s115 = sphi 0, %s117
    %s118 = sphi 0, %s115
    %s119 = sphi 0, %s118
    %s135 = sphi 0, %s119
  $region4: #{reconstruct_network.1} parent=0 // loop_header_branch
    %12 = sbr.rel (%p10) target = $region8
  $region5: #{reconstruct_network.1} parent=0 // loop_body
    %s14 = ssub.s32 %s9, 1
    %s15 = ssub.s32 %s9, 2
    %s22 = sadd.s32 1, %s17
    %p23 = scmp.ge.s32.totalorder %s22, 1
    %s24 = scalar_select %p23, 0, %s22
    %s25 = sadd.s32 1, %s16
    %s26 = scalar_select %p23, %s25, %s16
    %p27 = scmp.ge.s32.totalorder %s26, 2
    %s28 = scalar_select %p27, 0, %s26
    %s29 = ssub.s32 %s16, %s28
    %s30 = ssub.s32 %s17, %s24
    %s31 = sor.u32 %s29, %s30
    %p32 = scmp.eq.s32.totalorder %s31, 0
    %s34 = sadd.s32 %s33, 1
    %s35 = scalar_select %p32, %s33, %s34
    %p38 = pneg %p32
    %p39 = scmp.eq.s32.totalorder %s9, 1
    %p40 = por %p38, %p39
    %p41 = scmp.ne.s32.totalorder %s33, %s36
    %p42 = scmp.eq.s32.totalorder %s9, 0
    %p43 = por %p41, %p42
    %p44 = scmp.ne.s32.totalorder %s33, %s36
    %p45 = scmp.eq.s32.totalorder %s14, 1
    %p46 = por %p44, %p45
    %p47 = scmp.ne.s32.totalorder %s36, %s37
    %p48 = scmp.eq.s32.totalorder %s14, 0
    %p49 = por %p47, %p48
    %p50 = scmp.ne.s32.totalorder %s36, %s37
    %p51 = scmp.eq.s32.totalorder %s15, 1
    %p52 = por %p50, %p51
    %p54 = scmp.ne.s32.totalorder %s37, %s53
    %p55 = scmp.eq.s32.totalorder %s15, 0
    %p56 = por %p54, %p55
    %s57 = ssub.s32 %s16, %s28
    %s58 = ssub.s32 %s17, %s24
    %s59 = sor.u32 %s57, %s58
    %p60 = scmp.eq.s32.totalorder %s59, 0
    %s62 = sadd.s32 %s61, 1
    %s63 = scalar_select %p60, %s61, %s62
    %p66 = pneg %p60
    %p67 = scmp.eq.s32.totalorder %s9, 1
    %p68 = por %p66, %p67
    %p69 = scmp.ne.s32.totalorder %s61, %s64
    %p70 = scmp.eq.s32.totalorder %s9, 0
    %p71 = por %p69, %p70
    %p72 = scmp.ne.s32.totalorder %s61, %s64
    %p73 = scmp.eq.s32.totalorder %s14, 1
    %p74 = por %p72, %p73
    %p75 = scmp.ne.s32.totalorder %s64, %s65
    %p76 = scmp.eq.s32.totalorder %s14, 0
    %p77 = por %p75, %p76
    %p78 = scmp.ne.s32.totalorder %s64, %s65
    %p79 = scmp.eq.s32.totalorder %s15, 1
    %p80 = por %p78, %p79
    %p82 = scmp.ne.s32.totalorder %s65, %s81
    %p83 = scmp.eq.s32.totalorder %s15, 0
    %p84 = por %p82, %p83
    %s85 = ssub.s32 %s16, %s28
    %p86 = scmp.eq.s32.totalorder %s85, 0
    %s88 = sadd.s32 %s87, 1
    %s89 = scalar_select %p86, %s87, %s88
    %p92 = pneg %p86
    %p93 = scmp.eq.s32.totalorder %s9, 1
    %p94 = por %p92, %p93
    %p95 = scmp.ne.s32.totalorder %s87, %s90
    %p96 = scmp.eq.s32.totalorder %s9, 0
    %p97 = por %p95, %p96
    %p98 = scmp.ne.s32.totalorder %s87, %s90
    %p99 = scmp.eq.s32.totalorder %s14, 1
    %p100 = por %p98, %p99
    %p101 = scmp.ne.s32.totalorder %s90, %s91
    %p102 = scmp.eq.s32.totalorder %s14, 0
    %p103 = por %p101, %p102
    %p104 = scmp.ne.s32.totalorder %s90, %s91
    %p105 = scmp.eq.s32.totalorder %s15, 1
    %p106 = por %p104, %p105
    %p108 = scmp.ne.s32.totalorder %s91, %s107
    %p109 = scmp.eq.s32.totalorder %s15, 0
    %p110 = por %p108, %p109
    %s111 = ssub.s32 %s16, %s28
    %s112 = ssub.s32 %s17, %s24
    %s113 = sor.u32 %s111, %s112
    %p114 = scmp.eq.s32.totalorder %s113, 0
    %s116 = sadd.s32 %s115, 1
    %s117 = scalar_select %p114, %s115, %s116
    %p120 = pneg %p114
    %p121 = scmp.eq.s32.totalorder %s9, 1
    %p122 = por %p120, %p121
    %p123 = scmp.ne.s32.totalorder %s115, %s118
    %p124 = scmp.eq.s32.totalorder %s9, 0
    %p125 = por %p123, %p124
    %p126 = scmp.ne.s32.totalorder %s115, %s118
    %p127 = scmp.eq.s32.totalorder %s14, 1
    %p128 = por %p126, %p127
    %p129 = scmp.ne.s32.totalorder %s118, %s119
    %p130 = scmp.eq.s32.totalorder %s14, 0
    %p131 = por %p129, %p130
    %p132 = scmp.ne.s32.totalorder %s118, %s119
    %p133 = scmp.eq.s32.totalorder %s15, 1
    %p134 = por %p132, %p133
    %p136 = scmp.ne.s32.totalorder %s119, %s135
    %p137 = scmp.eq.s32.totalorder %s15, 0
    %p138 = por %p136, %p137
    %p139 = scmp.le.s32.totalorder 1, %s9
    %p140 = scmp.lt.s32.totalorder %s9, 3
    %p141 = pnand %p139, %p140
    %p142 = pneg %p141
    // Predicated region
    $region9: #{reconstruct_network.1} parent=5 // pred_check
      _
    $region10: #{reconstruct_network.1} parent=5 // pred_check_branch
      %144 = sbr.rel (%p141) target = $region12
    $region11: #{reconstruct_network.1} parent=5 // pred_region
      %s145 = ssub.s32 %s9, 1
    $region12: #{reconstruct_network.1} parent=5 // pred_fallthru
      _
    %p146 = scmp.lt.s32.totalorder %s9, 2
    // Predicated region
    $region13: #{reconstruct_network.1} parent=5 // pred_check
      %p147 = pneg %p146
    $region14: #{reconstruct_network.1} parent=5 // pred_check_branch
      %149 = sbr.rel (%p147) target = $region16
    $region15: #{reconstruct_network.1} parent=5 // pred_region
      // Predicated region
      $region17: #{reconstruct_network.1} parent=15 // pred_check
        %p150 = pneg %p43
      $region18: #{reconstruct_network.1} parent=15 // pred_check_branch
        %152 = sbr.rel (%p150) target = $region20
      $region19: #{reconstruct_network.1} parent=15 // pred_region
        %s153 = smul.u32 2, %s17
        %p154 = scmp.lt.s32.totalorder %s16, 1
        %s155 = scalar_select %p154, %s16, 1
        %p156 = scmp.lt.s32.totalorder %s153, 1
        %s157 = scalar_select %p156, %s153, 1
        %s158 = smul.addr %s155, 8
        %s159 = sadd.s32 %s157, %s158
        %s160 = smul.addr %s159, 8
        %s161 = scalar_lea.vmem %s0, %s160
        %s162 = smul.u32 2, %s17
      $region20: #{reconstruct_network.1} parent=15 // pred_fallthru
        _
      // Predicated region
      $region21: #{reconstruct_network.1} parent=15 // pred_check
        %p163 = pneg %p71
      $region22: #{reconstruct_network.1} parent=15 // pred_check_branch
        %165 = sbr.rel (%p163) target = $region24
      $region23: #{reconstruct_network.1} parent=15 // pred_region
        %s166 = smul.u32 2, %s17
        %p167 = scmp.lt.s32.totalorder %s16, 1
        %s168 = scalar_select %p167, %s16, 1
        %p169 = scmp.lt.s32.totalorder %s166, 1
        %s170 = scalar_select %p169, %s166, 1
        %s171 = smul.addr %s168, 2
        %s172 = sadd.s32 %s170, %s171
        %s173 = scalar_lea.vmem %s1, %s172
        %s174 = smul.u32 2, %s17
      $region24: #{reconstruct_network.1} parent=15 // pred_fallthru
        _
      // Predicated region
      $region25: #{reconstruct_network.1} parent=15 // pred_check
        %p175 = pneg %p97
      $region26: #{reconstruct_network.1} parent=15 // pred_check_branch
        %177 = sbr.rel (%p175) target = $region28
      $region27: #{reconstruct_network.1} parent=15 // pred_region
        %p178 = scmp.lt.s32.totalorder %s16, 1
        %s179 = scalar_select %p178, %s16, 1
        %s180 = smul.addr %s179, 4
        %s181 = smul.addr %s180, 8
        %s182 = scalar_lea.vmem %s2, %s181
      $region28: #{reconstruct_network.1} parent=15 // pred_fallthru
        _
    $region16: #{reconstruct_network.1} parent=5 // pred_fallthru
      _
    %p183 = scmp.le.s32.totalorder 1, %s9
    %p184 = scmp.lt.s32.totalorder %s9, 3
    %p185 = pnand %p183, %p184
    %p186 = pneg %p185
    // Predicated region
    $region29: #{reconstruct_network.1} parent=5 // pred_check
      _
    $region30: #{reconstruct_network.1} parent=5 // pred_check_branch
      %188 = sbr.rel (%p185) target = $region32
    $region31: #{reconstruct_network.1} parent=5 // pred_region
      %s189 = ssub.s32 %s9, 1
      %s190 = smul.u32 2, %s19
      %p191 = scmp.lt.s32.totalorder %s18, 1
      %s192 = scalar_select %p191, %s18, 1
      %p193 = scmp.lt.s32.totalorder %s190, 1
      %s194 = scalar_select %p193, %s190, 1
      %s195 = smul.addr %s192, 8
      %s196 = sadd.s32 %s194, %s195
      %s197 = smul.addr %s196, 8
      %s198 = scalar_lea.vmem %s0, %s197
      %p199 = pneg %p49
      %p200 = pneg %p46
      %s201 = smul.u32 2, %s19
      %p202 = scmp.lt.s32.totalorder %s18, 1
      %s203 = scalar_select %p202, %s18, 1
      %p204 = scmp.lt.s32.totalorder %s201, 1
      %s205 = scalar_select %p204, %s201, 1
      %s206 = smul.addr %s203, 2
      %s207 = sadd.s32 %s205, %s206
      %s208 = scalar_lea.vmem %s1, %s207
      %p209 = pneg %p77
      %p210 = pneg %p74
      %p211 = scmp.lt.s32.totalorder %s18, 1
      %s212 = scalar_select %p211, %s18, 1
      %s213 = smul.addr %s212, 4
      %s214 = smul.addr %s213, 8
      %s215 = scalar_lea.vmem %s2, %s214
      %p216 = pneg %p103
      %p217 = pneg %p100
      %p218 = pneg %p131
      %p219 = pneg %p128
      %s220 = smul.u32 2, %s19
      %p221 = scmp.lt.s32.totalorder %s18, 1
      %s222 = scalar_select %p221, %s18, 1
      %p223 = scmp.lt.s32.totalorder %s220, 1
      %s224 = scalar_select %p223, %s220, 1
      %s225 = smul.addr %s222, 8
      %s226 = sadd.s32 %s224, %s225
      %s227 = smul.addr %s226, 8
      %s228 = scalar_lea.vmem %s3, %s227
      %s229 = smul.u32 2, %s19
      %p230 = scmp.lt.s32.totalorder %s18, 1
      %s231 = scalar_select %p230, %s18, 1
      %p232 = scmp.lt.s32.totalorder %s229, 1
      %s233 = scalar_select %p232, %s229, 1
      %s234 = smul.addr %s231, 8
      %s235 = sadd.s32 %s233, %s234
      %s236 = smul.addr %s235, 8
      %s237 = scalar_lea.vmem %s0, %s236
      %s238 = smul.u32 2, %s19
      %s239 = smul.u32 2, %s19
      %p240 = scmp.lt.s32.totalorder %s18, 1
      %s241 = scalar_select %p240, %s18, 1
      %p242 = scmp.lt.s32.totalorder %s239, 1
      %s243 = scalar_select %p242, %s239, 1
      %s244 = smul.addr %s241, 2
      %s245 = sadd.s32 %s243, %s244
      %s246 = scalar_lea.vmem %s1, %s245
      %s247 = smul.u32 2, %s19
      %p248 = scmp.lt.s32.totalorder %s18, 1
      %s249 = scalar_select %p248, %s18, 1
      %s250 = smul.addr %s249, 4
      %s251 = smul.addr %s250, 8
      %s252 = scalar_lea.vmem %s2, %s251
      %s253 = smul.u32 2, %s19
      %p254 = scmp.lt.s32.totalorder %s18, 1
      %s255 = scalar_select %p254, %s18, 1
      %p256 = scmp.lt.s32.totalorder %s253, 1
      %s257 = scalar_select %p256, %s253, 1
      %s258 = smul.addr %s255, 8
      %s259 = sadd.s32 %s257, %s258
      %s260 = smul.addr %s259, 8
      %s261 = scalar_lea.vmem %s3, %s260
      %s262 = smul.u32 2, %s19
      %v263 = vld [vmem:[%s237] sm:$0xff]
      %v264 = vld [vmem:[%s237 + $0x8] sm:$0xff]
      %v265 = vld [vmem:[%s237 + $0x10] sm:$0xff]
      %v266 = vld [vmem:[%s237 + $0x18] sm:$0xff]
      %v267 = vld [vmem:[%s237 + $0x20] sm:$0xff]
      %v268 = vld [vmem:[%s237 + $0x28] sm:$0xff]
      %v269 = vld [vmem:[%s237 + $0x30] sm:$0xff]
      %v270 = vld [vmem:[%s237 + $0x38] sm:$0xff]
      %v271 = vld [vmem:[%s246] sm:$0x3]
      %v272 = vld [vmem:[%s252] sm:$0xff]
      %v273 = vld [vmem:[%s252 + $0x8] sm:$0xff]
      %v274 = vld [vmem:[%s252 + $0x10] sm:$0xff]
      %v275 = vld [vmem:[%s252 + $0x18] sm:$0xff]
      %v277 = vperm.slane %v271, 0
      %v278 = vperm.slane %v271, 1
      %v281 = vmul.f32 %v263, %v277
      %v282 = vmul.f32 %v264, %v278
      %v283 = vmul.f32 %v265, %v277
      %v284 = vmul.f32 %v266, %v278
      %v285 = vmul.f32 %v267, %v277
      %v286 = vmul.f32 %v268, %v278
      %v287 = vmul.f32 %v269, %v277
      %v288 = vmul.f32 %v270, %v278
      %290 = vset.pattern.permute.xlu0 0
      %291 = vperm.xlu0 %290, %v272
      %v292 = vpop.permute.xlu0 %291
      %295 = vset.pattern.permute.xlu0 0
      %296 = vperm.xlu0 %295, %v273
      %v297 = vpop.permute.xlu0 %296
      %300 = vset.pattern.permute.xlu0 0
      %301 = vperm.xlu0 %300, %v274
      %v302 = vpop.permute.xlu0 %301
      %305 = vset.pattern.permute.xlu0 0
      %306 = vperm.xlu0 %305, %v275
      %v307 = vpop.permute.xlu0 %306
      %v309 = vmul.f32 %v281, %v292
      %v310 = vmul.f32 %v282, %v292
      %v311 = vmul.f32 %v283, %v297
      %v312 = vmul.f32 %v284, %v297
      %v313 = vmul.f32 %v285, %v302
      %v314 = vmul.f32 %v286, %v302
      %v315 = vmul.f32 %v287, %v307
      %v316 = vmul.f32 %v288, %v307
      %317 = vst [vmem:[%s261] sm:$0xff] %v309
      %318 = vst [vmem:[%s261 + $0x8] sm:$0xff] %v310
      %319 = vst [vmem:[%s261 + $0x10] sm:$0xff] %v311
      %320 = vst [vmem:[%s261 + $0x18] sm:$0xff] %v312
      %321 = vst [vmem:[%s261 + $0x20] sm:$0xff] %v313
      %322 = vst [vmem:[%s261 + $0x28] sm:$0xff] %v314
      %323 = vst [vmem:[%s261 + $0x30] sm:$0xff] %v315
      %324 = vst [vmem:[%s261 + $0x38] sm:$0xff] %v316
      %s325 = smul.u32 2, %s19
      %p326 = scmp.lt.s32.totalorder %s18, 1
      %s327 = scalar_select %p326, %s18, 1
      %p328 = scmp.lt.s32.totalorder %s325, 1
      %s329 = scalar_select %p328, %s325, 1
      %s330 = smul.addr %s327, 8
      %s331 = sadd.s32 %s329, %s330
      %s332 = smul.addr %s331, 8
      %s333 = scalar_lea.vmem %s3, %s332
      // Predicated region
      $region33: #{reconstruct_network.1} parent=31 // pred_check
        %p334 = pneg %p128
      $region34: #{reconstruct_network.1} parent=31 // pred_check_branch
        %336 = sbr.rel (%p334) target = $region36
      $region35: #{reconstruct_network.1} parent=31 // pred_region
        %s337 = smul.u32 2, %s19
      $region36: #{reconstruct_network.1} parent=31 // pred_fallthru
        _
    $region32: #{reconstruct_network.1} parent=5 // pred_fallthru
      _
    %p338 = scmp.le.s32.totalorder 2, %s9
    // Predicated region
    $region37: #{reconstruct_network.1} parent=5 // pred_check
      %p339 = pneg %p338
    $region38: #{reconstruct_network.1} parent=5 // pred_check_branch
      %341 = sbr.rel (%p339) target = $region40
    $region39: #{reconstruct_network.1} parent=5 // pred_region
      %s342 = ssub.s32 %s9, 2
      // Predicated region
      $region41: #{reconstruct_network.1} parent=39 // pred_check
        %p343 = pneg %p134
      $region42: #{reconstruct_network.1} parent=39 // pred_check_branch
        %345 = sbr.rel (%p343) target = $region44
      $region43: #{reconstruct_network.1} parent=39 // pred_region
        %s346 = smul.u32 2, %s21
        %p347 = scmp.lt.s32.totalorder %s20, 1
        %s348 = scalar_select %p347, %s20, 1
        %p349 = scmp.lt.s32.totalorder %s346, 1
        %s350 = scalar_select %p349, %s346, 1
        %s351 = smul.addr %s348, 8
        %s352 = sadd.s32 %s350, %s351
        %s353 = smul.addr %s352, 8
        %s354 = scalar_lea.vmem %s3, %s353
      $region44: #{reconstruct_network.1} parent=39 // pred_fallthru
        _
    $region40: #{reconstruct_network.1} parent=5 // pred_fallthru
      _
  $region6: #{reconstruct_network.1} parent=0 // loop_footer
    %s13 = sadd.s32 1, %s9
  $region7: #{reconstruct_network.1} parent=0 // loop_footer_branch
    %8 = sbr.rel target = $region3
  $region8: #{reconstruct_network.1} parent=0 // loop_exit
    _

</llo_original>
